<compile_context>
chip_gen: v5e
topology: v5e:2x2
jax: 0.10.0
libtpu: 0.0.40
codegen_flags: <defaults>
</compile_context>

<pallas_src>
import functools
import math

import jax
import jax.numpy as jnp
from jax import lax
from jax.experimental import pallas as pl
from jax.experimental.pallas import tpu as pltpu


@functools.lru_cache(maxsize=None)
def _roll_matches_numpy() -> bool:
    """One-time tiny probe: pin down pltpu.roll's rotation convention so the
    conv taps can never come out spatially flipped (runs once, outside jit)."""
    def k(x_ref, o_ref):
        o_ref[...] = pltpu.roll(x_ref[...], 1, axis=1)
    x = jnp.broadcast_to(jnp.arange(128, dtype=jnp.float32), (8, 128))
    y = pl.pallas_call(k, out_shape=jax.ShapeDtypeStruct((8, 128), jnp.float32))(x)
    return bool(y[0, 1] == 0.0)   # np.roll([0,1,...], 1)[1] == 0


@functools.lru_cache(maxsize=None)
def _vmem_capacity_bytes() -> int:
    """Physical VMEM per TensorCore (v5e/v6e: 128 MiB, v7x: 64 MiB)."""
    try:
        return int(pltpu.get_tpu_info().vmem_capacity_bytes)
    except Exception:
        return 64 << 20   # conservative fallback (v7x per-core VMEM)


def _padded_width(H, W):
    """Smallest Wp >= W such that H*Wp is a multiple of 128 (lane-dense)."""
    if (H * W) % 128 == 0:
        return W
    step = 128 // math.gcd(H, 128)
    return ((W + step - 1) // step) * step


def _na_kernel(x_ref, wdw_ref, bdw_ref, wpw_ref, bpw_ref, o_ref, *,
               H, Wp, W, flip, use_bf16_mxu):
    # x_ref  : (Rin,  H*Wp)  Rin  = Nb*Cin folded (batch, channel) rows
    # wdw_ref: (Rin, 9)      depthwise 3x3 taps on the LANE axis, t=3*(oi+1)+(oj+1)
    # bdw_ref: (Rin, 1)      depthwise bias (tiled over the batch fold)
    # wpw_ref: (Rout, Rin)   block-diagonal 1x1-conv weight, Rout = Nb*Cout
    # bpw_ref: (Rout, 1)     pointwise bias (tiled)
    # o_ref  : (Rout, H*Wp)  lane-dense output (unmasked full-width stores)
    HWp = H * Wp

    def shifted(v, delta):
        """out[l] = v[(l + delta) mod HWp] along the lane (H*Wp) axis."""
        s = (-delta) % HWp
        if flip:
            s = (HWp - s) % HWp
        if s == 0:
            return v
        return pltpu.roll(v, s, axis=1)

    x = x_ref[...].astype(jnp.float32)
    lane = lax.broadcasted_iota(jnp.int32, (1, HWp), 1)
    col = lane % Wp
    row = lane // Wp

    # Column (W) taps: two full-width XLU lane-rolls + edge masks.  (The mask
    # uses the *logical* W: taps reaching into padded zero columns are already
    # zero, and the mask kills the wrap-around when Wp == W.)
    x_cm1 = jnp.where(col >= 1, shifted(x, -1), 0.0)       # x[r, c-1]
    x_cp1 = jnp.where(col <= W - 2, shifted(x, 1), 0.0)    # x[r, c+1]
    cols = (x_cm1, x, x_cp1)

    wdw = wdw_ref[...].astype(jnp.float32)                 # (Rin, 9): one padded tile

    def w_tap(oi, oj):                                     # (Rin, 1) per-row scalar
        t = 3 * (oi + 1) + (oj + 1)
        return wdw[:, t:t + 1]

    def row_sum(oi):                                       # sum over 3 column taps
        return (cols[0] * w_tap(oi, -1)
                + cols[1] * w_tap(oi, 0)
                + cols[2] * w_tap(oi, 1))

    # Row (H) taps: two more lane-rolls (by +/-Wp) + edge masks.  Total 4 rolls
    # for the 9-tap depthwise conv instead of 9 unaligned sublane slices.
    acc = row_sum(0)
    acc = acc + jnp.where(row >= 1, shifted(row_sum(-1), -Wp), 0.0)
    acc = acc + jnp.where(row <= H - 2, shifted(row_sum(1), Wp), 0.0)

    acc = jnp.maximum(acc + bdw_ref[...].astype(jnp.float32), 0.0)   # bias + ReLU

    # Pointwise 1x1 conv: one lane-dense matmul (Rout,Rin)@(Rin,HWp) on the MXU.
    # Optional bf16 operand path for v6e/v7x MXUs (f32 accumulation); off by
    # default so results stay bit-comparable to the f32 reference at 1e-5.
    if use_bf16_mxu:
        y = jnp.dot(wpw_ref[...].astype(jnp.bfloat16), acc.astype(jnp.bfloat16),
                    preferred_element_type=jnp.float32)
    else:
        y = jnp.dot(wpw_ref[...].astype(jnp.float32), acc,
                    preferred_element_type=jnp.float32)
    y = y + bpw_ref[...].astype(jnp.float32)
    o_ref[...] = jax.nn.sigmoid(y).astype(o_ref.dtype)


def _pick_batch_block(N, Cin, Cout, HWp, itemsize, vmem_budget):
    """Largest per-step batch block Nb (a divisor of N) such that
      * folded row counts are sublane-aligned (or the block covers the array),
      * the block-diagonal contraction stays inside one MXU K-tile
        (Rin = Nb*Cin <= 128) so the kron'd zeros cost no extra MXU passes
        and the weight operand does not grow quadratically in Nb,
      * the working set (double-buffered I/O blocks + resident weights +
        ~6 block-sized f32 temporaries) fits the VMEM budget,
      * and, when possible, N//Nb >= 2 so the batch grid axis can shard
        across both TensorCores of a v7x chip (dimension_semantics parallel).
    """
    rin_cap = max(128, Cin)          # one f32 K-tile; never below one image

    def vmem_need(nb):
        rin, rout = nb * Cin, nb * Cout
        blk = max(rin, rout) * HWp * 4                     # one f32 temporary
        io = 2 * (rin + rout) * HWp * itemsize             # double-buffered x / out
        weights = 2 * (rout * rin * 4                      # wpw_big
                       + rin * 128 * 4                     # wdw (lane-padded)
                       + (rin + rout) * 128 * 4)           # biases (lane-padded)
        return io + weights + 6 * blk                      # ~6 live temporaries

    good = [nb for nb in range(1, N + 1)
            if N % nb == 0
            and (nb == N or ((nb * Cin) % 8 == 0 and (nb * Cout) % 8 == 0))
            and nb * Cin <= rin_cap
            and vmem_need(nb) <= vmem_budget]
    if not good:
        # Full-array blocks are always layout-legal; this disables batching /
        # megacore sharding for odd shapes but keeps the kernel correct.
        return N
    multi = [nb for nb in good if nb <= N // 2]            # keep >= 2 grid steps
    return max(multi) if multi else max(good)


@functools.partial(jax.jit, static_argnames=("flip", "use_bf16_mxu"))
def _na_forward_impl(x_nchw, w_dw, b_dw, w_pw, b_pw, *, flip, use_bf16_mxu=False):
    N, Cin, H, W = x_nchw.shape
    Cout = w_pw.shape[0]
    Wp = _padded_width(H, W)
    HWp = H * Wp
    itemsize = jnp.dtype(x_nchw.dtype).itemsize

    capacity = _vmem_capacity_bytes()
    vmem_budget = int(0.45 * capacity)       # leave headroom for the pipeliner
    Nb = _pick_batch_block(N, Cin, Cout, HWp, itemsize, vmem_budget)
    Rin, Rout = Nb * Cin, Nb * Cout
    grid = (N // Nb,)

    # Lane-dense, transpose-free layout: fold (batch, channel) into sublane
    # rows, keep H*Wp (a multiple of 128) on the lane axis.  Width padding is
    # only materialized when H*W is not already lane-aligned.
    if Wp != W:
        x_nchw = jnp.pad(x_nchw, ((0, 0), (0, 0), (0, 0), (0, Wp - W)))
    x2d = x_nchw.reshape(N * Cin, HWp)

    # Depthwise 3x3 taps: (Cin,1,3,3) -> (Rin, 9) with taps on the LANE axis,
    # one padded VMEM tile total (vs nine lane-padded columns), tiled over the
    # batch fold so row r of x2d pairs with row r of wdw.
    wdw = jnp.tile(w_dw.reshape(Cin, 9), (Nb, 1))                # (Rin, 9)
    bdw = jnp.tile(b_dw, (Nb,)).reshape(Rin, 1)

    # Pointwise weight -> block-diagonal so one MXU matmul covers all Nb
    # images; Rin is capped at one K-tile by _pick_batch_block so the zeros
    # of the kron are free.
    wpw = w_pw.reshape(Cout, Cin)
    wpw_big = jnp.kron(jnp.eye(Nb, dtype=wpw.dtype), wpw)        # (Rout, Rin)
    bpw_big = jnp.tile(b_pw, (Nb,)).reshape(Rout, 1)

    kernel = functools.partial(_na_kernel, H=H, Wp=Wp, W=W, flip=flip,
                               use_bf16_mxu=use_bf16_mxu)

    # Advisory cost so XLA schedules the (tiny) weight-prep ops around the
    # kernel instead of serializing on it.
    try:
        cost = pl.CostEstimate(
            flops=N * Cin * HWp * 18 + 2 * N * Cout * Cin * HWp,
            transcendentals=N * Cout * HWp,
            bytes_accessed=(x2d.size + N * Cout * HWp) * itemsize
                           + (wpw_big.size + wdw.size + Rin + Rout) * 4)
    except Exception:
        cost = None

    out2d = pl.pallas_call(
        kernel,
        out_shape=jax.ShapeDtypeStruct((N * Cout, HWp), x_nchw.dtype),
        grid_spec=pltpu.PrefetchScalarGridSpec(
            num_scalar_prefetch=0,
            grid=grid,
            in_specs=[
                pl.BlockSpec((Rin, HWp), lambda b: (b, 0)),
                # Grid-invariant weight operands (constant index_maps): the
                # pipeliner fetches them once and never re-DMAs them.  Their
                # (small, double-buffered) footprint is already included in
                # the block-size budget above.
                pl.BlockSpec((Rin, 9), lambda b: (0, 0)),
                pl.BlockSpec((Rin, 1), lambda b: (0, 0)),
                pl.BlockSpec((Rout, Rin), lambda b: (0, 0)),
                pl.BlockSpec((Rout, 1), lambda b: (0, 0)),
            ],
            out_specs=pl.BlockSpec((Rout, HWp), lambda b: (b, 0)),
        ),
        compiler_params=pltpu.CompilerParams(
            dimension_semantics=("parallel",),
            vmem_limit_bytes=int(min(0.75 * capacity, 128 << 20))),
        cost_estimate=cost,
    )(x2d, wdw, bdw, wpw_big, bpw_big)

    out = out2d.reshape(N, Cout, H, Wp)
    if Wp != W:
        out = out[..., :W]
    return out


def na_forward(x_nchw, w_dw, b_dw, w_pw, b_pw, use_bf16_mxu=False):
    """x_nchw: (N, Cin, H, W). w_dw: (Cin,1,3,3). b_dw: (Cin,).
    w_pw: (Cout, Cin, 1, 1). b_pw: (Cout,). Returns (N, Cout, H, W).
    Set use_bf16_mxu=True on v6e/v7x for the native-bf16 MXU path (relax the
    comparison tolerance accordingly)."""
    flip = not _roll_matches_numpy()   # resolved once, outside jit
    return _na_forward_impl(x_nchw, w_dw, b_dw, w_pw, b_pw,
                            flip=flip, use_bf16_mxu=use_bf16_mxu)


def na_reference(x_nchw, w_dw, b_dw, w_pw, b_pw):
    """Pure-JAX reference mirroring the PyTorch module (NCHW)."""
    Cin = x_nchw.shape[1]
    y = lax.conv_general_dilated(
        x_nchw, w_dw, window_strides=(1, 1), padding=((1, 1), (1, 1)),
        dimension_numbers=("NCHW", "OIHW", "NCHW"), feature_group_count=Cin)
    y = y + b_dw[None, :, None, None]
    y = jnp.maximum(y, 0.0)
    z = lax.conv_general_dilated(
        y, w_pw, window_strides=(1, 1), padding="VALID",
        dimension_numbers=("NCHW", "OIHW", "NCHW"))
    z = z + b_pw[None, :, None, None]
    return jax.nn.sigmoid(z)


if __name__ == "__main__":
    key = jax.random.PRNGKey(0)
    N, Cin, Cout, H, W = 2, 4, 8, 16, 16

    k_x, k_wdw, k_bdw, k_wpw, k_bpw = jax.random.split(key, 5)
    x = jax.random.normal(k_x, (N, Cin, H, W), jnp.float32)
    # Deterministic synthetic parameters (same shapes as the nn.Module's).
    w_dw = 0.1 * jax.random.normal(k_wdw, (Cin, 1, 3, 3), jnp.float32)
    b_dw = 0.1 * jax.random.normal(k_bdw, (Cin,), jnp.float32)
    w_pw = 0.1 * jax.random.normal(k_wpw, (Cout, Cin, 1, 1), jnp.float32)
    b_pw = 0.1 * jax.random.normal(k_bpw, (Cout,), jnp.float32)

    out = jax.block_until_ready(na_forward(x, w_dw, b_dw, w_pw, b_pw))
    ref = jax.block_until_ready(na_reference(x, w_dw, b_dw, w_pw, b_pw))

    assert out.shape == (N, Cout, H, W)
    assert jnp.allclose(out, ref, rtol=1e-5, atol=1e-5)
    print("KERNEL_OK")
</pallas_src>

<mosaic_0001>
module attributes {stable_mosaic.version = 11 : i64} {
  func.func @k(%arg0: memref<8x128xf32, #tpu.memory_space<vmem>>, %arg1: memref<8x128xf32, #tpu.memory_space<vmem>>) attributes {dimension_semantics = [], scalar_prefetch = 0 : i64, scratch_operands = 0 : i64, tpu.core_type = #tpu.core_type<tc>} {
    %c0 = arith.constant 0 : index
    %c0_0 = arith.constant 0 : index
    %0 = vector.load %arg0[%c0, %c0_0] : memref<8x128xf32, #tpu.memory_space<vmem>>, vector<8x128xf32>
    %c1_i32 = arith.constant 1 : i32
    %1 = tpu.dynamic_rotate %0 by %c1_i32 dim 1 : vector<8x128xf32>, i32 -> vector<8x128xf32>
    %c0_1 = arith.constant 0 : index
    %c0_2 = arith.constant 0 : index
    %2 = vector.load %arg1[%c0_1, %c0_2] : memref<8x128xf32, #tpu.memory_space<vmem>>, vector<8x128xf32>
    tpu.vector_store %arg1[%c0_1, %c0_2], %1 {strides = array<i32>} : memref<8x128xf32, #tpu.memory_space<vmem>>, vector<8x128xf32>,
    return
  }
}

</mosaic_0001>

<llo_original>
// kernel: tpu_custom_call.1
$region0: #{tpu_custom_call.1}
  #allocation0 [shape = 'u32[]', space=smem, size = 0x4, offset = 0x4, fixed_abs, tag = 'smem constant byte address 0x4 - core index']
  #allocation1 [shape = 'u32[72,128]{1,0:T(1,128)}', space=vmem, size = 0x9000, scoped, tag = 'internal scratch']
  %s0 = inlined_call_operand.hbm [shape: f32[8,128], index: 0, kind: input, shape index: {}]
  %s1 = inlined_call_operand.hbm [shape: f32[8,128], index: 1, kind: output, shape index: {}]
  %s2 = sld [smem:[#allocation0]]
  $region18: #{tpu_custom_call.1} parent=0
    _
  %s4 = ssub.s32 1, %s2
  %s5 = scalar_select 0, %s4, %s2
  $region1: #{tpu_custom_call.1} parent=0
    #allocation2 [shape = 'u8[4096]{0}', space=vmem, size = 0x1000, scoped, tag = 'input window, operand 0, single buffered']
    #allocation3 [shape = 's32[1]{0}', space=sflag, size = 0x4, scoped, tag = 'scoped memory for tpu_custom_call.1']
    #allocation4 [shape = 's32[1]{0}', space=sflag, size = 0x4, scoped, tag = 'scoped memory for tpu_custom_call.1']
    #allocation5 [shape = 'u8[4096]{0}', space=vmem, size = 0x1000, scoped, tag = 'output window, operand 0, single buffered']
    %6 = vsyncpa [#allocation3], 0
    %7 = vsyncpa [#allocation4], 0
    // Predicated region
    $region2: #{tpu_custom_call.1} parent=1 // pred_check
      _
    $region3: #{tpu_custom_call.1} parent=1 // pred_check_branch
      %9 = sbr.rel (0) target = $region5
    $region4: #{tpu_custom_call.1} parent=1 // pred_region
      %11 = vsyncadd [#allocation3], 0
      %s13 = sshll.u32 %s0, 4
      %s14 = int_to_ptr.hbm [resolvable:$true] %s13
      %s15 = sshll.u32 [#allocation2], 4
      %s16 = int_to_ptr.vmem [resolvable:$true] %s15
      %18 = dma.hbm_to_vmem [thread:$0]  %s14, 128, %s16, [#allocation3]
    $region5: #{tpu_custom_call.1} parent=1 // pred_fallthru
      _
    // Predicated region
    $region6: #{tpu_custom_call.1} parent=1 // pred_check
      _
    $region7: #{tpu_custom_call.1} parent=1 // pred_check_branch
      %20 = sbr.rel (0) target = $region9
    $region8: #{tpu_custom_call.1} parent=1 // pred_region
      %22 = dma.done [#allocation3], 128
    $region9: #{tpu_custom_call.1} parent=1 // pred_fallthru
      _
    %v23 = vld [vmem:[#allocation2] sm:$0xff]
    %24 = vrot.lane.b32.xlu0 %v23, 1
    %v25 = vpop.permute.xlu0 %24
    %26 = vst [vmem:[#allocation5] sm:$0xff] %v25
    // Predicated region
    $region10: #{tpu_custom_call.1} parent=1 // pred_check
      _
    $region11: #{tpu_custom_call.1} parent=1 // pred_check_branch
      %28 = sbr.rel (0) target = $region13
    $region12: #{tpu_custom_call.1} parent=1 // pred_region
      %30 = vsyncadd [#allocation4], 0
      %s32 = sshll.u32 [#allocation5], 4
      %s33 = int_to_ptr.vmem [resolvable:$true] %s32
      %s34 = sshll.u32 %s1, 4
      %s35 = int_to_ptr.hbm [resolvable:$true] %s34
      %37 = dma.vmem_to_hbm [thread:$0]  %s33, 128, %s35, [#allocation4]
    $region13: #{tpu_custom_call.1} parent=1 // pred_fallthru
      _
    // Predicated region
    $region14: #{tpu_custom_call.1} parent=1 // pred_check
      _
    $region15: #{tpu_custom_call.1} parent=1 // pred_check_branch
      %39 = sbr.rel (0) target = $region17
    $region16: #{tpu_custom_call.1} parent=1 // pred_region
      %41 = dma.done [#allocation4], 128
    $region17: #{tpu_custom_call.1} parent=1 // pred_fallthru
      _
    %42 = vsyncpa [#allocation3], 1
    %43 = vsyncpa [#allocation4], 1

</llo_original>
